<compile_context>
chip_gen: v6e
topology: v6e:2x2x1
jax: 0.10.0
libtpu: 0.0.40
codegen_flags: <defaults>
</compile_context>

<pallas_src>
import math

import jax
import jax.numpy as jnp
from jax.experimental import pallas as pl
from jax.experimental.pallas import tpu as pltpu


# dot_general dimension numbers contracting the minor dim of both operands
# ("A @ B.T") -- same pattern as the Pallas flash-attention q@k.T.
NT_DIMS = (((1,), (1,)), ((), ()))


def mlp_kernel(x_ref, w1_ref, b1_ref, w2_ref, b2_ref, w3_ref, b3_ref, o_ref):
    # x_ref: (TB, n_in).  Weights in torch (out, in) layout; biases (out, 1).
    # Layer 1 as an "NT" matmul so the result lands directly in transposed,
    # lane-dense layout: (10, n_in) x (TB, n_in)^T -> (10, TB).
    h1 = jax.lax.dot_general(w1_ref[...], x_ref[...], NT_DIMS,
                             preferred_element_type=jnp.float32)
    h1 = jnp.maximum(h1 + b1_ref[...], 0.0)                           # (10, TB)

    h2 = jnp.dot(w2_ref[...], h1, preferred_element_type=jnp.float32)
    h2 = jnp.maximum(h2 + b2_ref[...], 0.0)                           # (8, TB)

    z = jnp.dot(w3_ref[...], h2, preferred_element_type=jnp.float32)
    z = z + b3_ref[...]                                               # (1, TB)

    # Sigmoid: exp on the EUP + exact reciprocal (approx=True could violate
    # the 1e-5 tolerance).  Tail-safe in f32: exp overflow -> 0, underflow -> 1.
    o_ref[...] = pl.reciprocal(1.0 + jnp.exp(-z), approx=False)


def mlp_forward(x, params, *, tb=2048):
    """x: (B, n_inputs) float32. Returns (B, 1) float32."""
    w1, b1, w2, b2, w3, b3 = params
    B, n_in = x.shape
    assert tb % 256 == 0, "batch tile must be a multiple of 256 (MXU/lane align)"

    # Cap the tile so the grid keeps >= 2 parallel steps when B is large
    # enough (v7x: 2 TensorCores share the "parallel" axis). Floor at 256.
    tb_eff = min(tb, max(256, ((B // 2) // 256) * 256))
    grid = (pl.cdiv(B, tb_eff),)   # ragged last block OK: masked output store

    full = lambda a: pl.BlockSpec(a.shape, lambda i: (0,) * a.ndim)

    # Advisory cost for XLA's scheduler around the custom call.
    flops = 2 * B * (n_in * 10 + 10 * 8 + 8 * 1)
    param_bytes = 4 * (n_in * 10 + 10 + 10 * 8 + 8 + 8 + 1)
    cost = pl.CostEstimate(flops=flops,
                           transcendentals=B,
                           bytes_accessed=4 * B * (n_in + 1) + param_bytes)

    out = pl.pallas_call(
        mlp_kernel,
        out_shape=jax.ShapeDtypeStruct((1, B), jnp.float32),
        grid=grid,
        in_specs=[
            pl.BlockSpec((tb_eff, n_in), lambda i: (i, 0)),  # x: tiled on batch
            full(w1), full(b1),
            full(w2), full(b2),
            full(w3), full(b3),
        ],
        # Lane-dense output: (1, tb_eff) block of the (1, B) slab.
        out_specs=pl.BlockSpec((1, tb_eff), lambda i: (0, i)),
        compiler_params=pltpu.CompilerParams(
            dimension_semantics=("parallel",)),
        cost_estimate=cost,
    )(x, w1, b1, w2, b2, w3, b3)

    # (1, B) row-major reshape -> (B, 1); no data discarded, no extra copy pass.
    return out.reshape(B, 1)


def init_params(key, n_inputs):
    """Deterministic init matching the PyTorch module's init scheme.

    hidden1/hidden2 weights: kaiming_uniform_(nonlinearity='relu')
        -> U(-sqrt(6/fan_in), sqrt(6/fan_in))
    hidden3 weight: xavier_uniform_ -> U(-sqrt(6/(fan_in+fan_out)), ...)
    biases: torch.nn.Linear default -> U(-1/sqrt(fan_in), 1/sqrt(fan_in))

    Weights are kept in torch's (out_features, in_features) orientation since
    the kernel computes W @ x.T; biases are (out_features, 1).
    """
    keys = jax.random.split(key, 6)

    def kaiming_w(k, fan_in, fan_out):
        bound = math.sqrt(6.0 / fan_in)
        return jax.random.uniform(k, (fan_out, fan_in), jnp.float32, -bound, bound)

    def xavier_w(k, fan_in, fan_out):
        bound = math.sqrt(6.0 / (fan_in + fan_out))
        return jax.random.uniform(k, (fan_out, fan_in), jnp.float32, -bound, bound)

    def linear_b(k, fan_in, fan_out):
        bound = 1.0 / math.sqrt(fan_in)
        return jax.random.uniform(k, (fan_out, 1), jnp.float32, -bound, bound)

    w1 = kaiming_w(keys[0], n_inputs, 10)
    b1 = linear_b(keys[1], n_inputs, 10)
    w2 = kaiming_w(keys[2], 10, 8)
    b2 = linear_b(keys[3], 10, 8)
    w3 = xavier_w(keys[4], 8, 1)
    b3 = linear_b(keys[5], 8, 1)
    return (w1, b1, w2, b2, w3, b3)


def mlp_reference(x, params):
    """Pure-JAX reference for correctness checking."""
    w1, b1, w2, b2, w3, b3 = params
    h = jnp.maximum(x @ w1.T + b1.T, 0.0)
    h = jnp.maximum(h @ w2.T + b2.T, 0.0)
    return jax.nn.sigmoid(h @ w3.T + b3.T)


# TODO(synk): fit()/evaluate() (BCELoss + SGD training loop, accuracy) are host
# training-harness logic, not part of the forward pass, and are not translated.

if __name__ == "__main__":
    key = jax.random.PRNGKey(0)
    k_param, k_x = jax.random.split(key)

    n_inputs = 34   # tabular binary-classification width from the spec
    batch = 512     # small; tile cap gives 2 "parallel" grid steps (tb_eff=256)

    params = init_params(k_param, n_inputs)
    x = jax.random.normal(k_x, (batch, n_inputs), jnp.float32)

    out = mlp_forward(x, params, tb=2048)
    out = jax.block_until_ready(out)

    ref = mlp_reference(x, params)
    assert out.shape == (batch, 1)
    assert jnp.allclose(out, ref, atol=1e-5, rtol=1e-5), "mismatch vs reference"

    print("KERNEL_OK")
</pallas_src>

<mosaic_0001>
module attributes {stable_mosaic.version = 11 : i64} {
  func.func @mlp_kernel(%arg0: i32, %arg1: memref<256x34xf32, #tpu.memory_space<vmem>>, %arg2: memref<10x34xf32, #tpu.memory_space<vmem>>, %arg3: memref<10x1xf32, #tpu.memory_space<vmem>>, %arg4: memref<8x10xf32, #tpu.memory_space<vmem>>, %arg5: memref<8x1xf32, #tpu.memory_space<vmem>>, %arg6: memref<1x8xf32, #tpu.memory_space<vmem>>, %arg7: memref<1x1xf32, #tpu.memory_space<vmem>>, %arg8: memref<1x256xf32, #tpu.memory_space<vmem>>) attributes {dimension_semantics = [#tpu.dimension_semantics<parallel>], iteration_bounds = array<i64: 2>, scalar_prefetch = 0 : i64, scratch_operands = 0 : i64, tpu.core_type = #tpu.core_type<tc>, window_params = [{transform_indices = @transform_0, window_bounds = array<i64: 256, 34>}, {pipeline_mode = #tpu.pipeline_mode<synchronous>, transform_indices = @transform_1, window_bounds = array<i64: 10, 34>}, {pipeline_mode = #tpu.pipeline_mode<synchronous>, transform_indices = @transform_2, window_bounds = array<i64: 10, 1>}, {pipeline_mode = #tpu.pipeline_mode<synchronous>, transform_indices = @transform_3, window_bounds = array<i64: 8, 10>}, {pipeline_mode = #tpu.pipeline_mode<synchronous>, transform_indices = @transform_4, window_bounds = array<i64: 8, 1>}, {pipeline_mode = #tpu.pipeline_mode<synchronous>, transform_indices = @transform_5, window_bounds = array<i64: 1, 8>}, {pipeline_mode = #tpu.pipeline_mode<synchronous>, transform_indices = @transform_6, window_bounds = array<i64: 1, 1>}, {transform_indices = @transform_7, window_bounds = array<i64: 1, 256>}]} {
    %c0 = arith.constant 0 : index
    %c0_0 = arith.constant 0 : index
    %0 = vector.load %arg2[%c0, %c0_0] : memref<10x34xf32, #tpu.memory_space<vmem>>, vector<10x34xf32>
    %c0_1 = arith.constant 0 : index
    %c0_2 = arith.constant 0 : index
    %1 = vector.load %arg1[%c0_1, %c0_2] : memref<256x34xf32, #tpu.memory_space<vmem>>, vector<256x34xf32>
    %cst = arith.constant dense<0.000000e+00> : vector<10x256xf32>
    %2 = tpu.matmul %0, %1, %cst {dimension_numbers = #tpu.dot_dimension_numbers<[1], [1], [0], [0], [0, 0, 1, 0], [], []>} : vector<10x34xf32>, vector<256x34xf32>, vector<10x256xf32> -> vector<10x256xf32>
    %c0_3 = arith.constant 0 : index
    %c0_4 = arith.constant 0 : index
    %3 = vector.load %arg3[%c0_3, %c0_4] : memref<10x1xf32, #tpu.memory_space<vmem>>, vector<10x1xf32>
    %4 = vector.broadcast %3 : vector<10x1xf32> to vector<10x256xf32>
    %5 = arith.addf %2, %4 : vector<10x256xf32>
    %cst_5 = arith.constant 0.000000e+00 : f32
    %6 = vector.broadcast %cst_5 : f32 to vector<10x256xf32>
    %7 = arith.maximumf %5, %6 : vector<10x256xf32>
    %c0_6 = arith.constant 0 : index
    %c0_7 = arith.constant 0 : index
    %8 = vector.load %arg4[%c0_6, %c0_7] : memref<8x10xf32, #tpu.memory_space<vmem>>, vector<8x10xf32>
    %cst_8 = arith.constant dense<0.000000e+00> : vector<8x256xf32>
    %9 = tpu.matmul %8, %7, %cst_8 {dimension_numbers = #tpu.dot_dimension_numbers<[1], [0], [0], [1], [0, 0, 1, 1], [], []>} : vector<8x10xf32>, vector<10x256xf32>, vector<8x256xf32> -> vector<8x256xf32>
    %c0_9 = arith.constant 0 : index
    %c0_10 = arith.constant 0 : index
    %10 = vector.load %arg5[%c0_9, %c0_10] : memref<8x1xf32, #tpu.memory_space<vmem>>, vector<8x1xf32>
    %11 = vector.broadcast %10 : vector<8x1xf32> to vector<8x256xf32>
    %12 = arith.addf %9, %11 : vector<8x256xf32>
    %cst_11 = arith.constant 0.000000e+00 : f32
    %13 = vector.broadcast %cst_11 : f32 to vector<8x256xf32>
    %14 = arith.maximumf %12, %13 : vector<8x256xf32>
    %c0_12 = arith.constant 0 : index
    %c0_13 = arith.constant 0 : index
    %15 = vector.load %arg6[%c0_12, %c0_13] : memref<1x8xf32, #tpu.memory_space<vmem>>, vector<1x8xf32>
    %cst_14 = arith.constant dense<0.000000e+00> : vector<1x256xf32>
    %16 = tpu.matmul %15, %14, %cst_14 {dimension_numbers = #tpu.dot_dimension_numbers<[1], [0], [0], [1], [0, 0, 1, 1], [], []>} : vector<1x8xf32>, vector<8x256xf32>, vector<1x256xf32> -> vector<1x256xf32>
    %c0_15 = arith.constant 0 : index
    %c0_16 = arith.constant 0 : index
    %17 = vector.load %arg7[%c0_15, %c0_16] : memref<1x1xf32, #tpu.memory_space<vmem>>, vector<1x1xf32>
    %18 = vector.broadcast %17 : vector<1x1xf32> to vector<1x256xf32>
    %19 = arith.addf %16, %18 : vector<1x256xf32>
    %cst_17 = arith.constant 0.000000e+00 : f32
    %20 = vector.broadcast %cst_17 : f32 to vector<1x256xf32>
    %21 = arith.subf %20, %19 : vector<1x256xf32>
    %22 = math.exp %21 : vector<1x256xf32>
    %cst_18 = arith.constant 1.000000e+00 : f32
    %23 = vector.broadcast %cst_18 : f32 to vector<1x256xf32>
    %24 = arith.addf %23, %22 : vector<1x256xf32>
    %25 = tpu.reciprocal %24 : vector<1x256xf32> -> vector<1x256xf32>
    %c0_19 = arith.constant 0 : index
    %c0_20 = arith.constant 0 : index
    %26 = vector.load %arg8[%c0_19, %c0_20] : memref<1x256xf32, #tpu.memory_space<vmem>>, vector<1x256xf32>
    tpu.vector_store %arg8[%c0_19, %c0_20], %25 {strides = array<i32>} : memref<1x256xf32, #tpu.memory_space<vmem>>, vector<1x256xf32>,
    return
  }
  func.func @transform_0(%arg0: i32) -> (i32, i32) {
    %c0_i32 = arith.constant 0 : i32
    %c0_i32_0 = arith.constant 0 : i32
    return %arg0, %c0_i32 : i32, i32
  }
  func.func @transform_1(%arg0: i32) -> (i32, i32) {
    %c0_i32 = arith.constant 0 : i32
    %c0_i32_0 = arith.constant 0 : i32
    %c0_i32_1 = arith.constant 0 : i32
    return %c0_i32, %c0_i32_0 : i32, i32
  }
  func.func @transform_2(%arg0: i32) -> (i32, i32) {
    %c0_i32 = arith.constant 0 : i32
    %c0_i32_0 = arith.constant 0 : i32
    %c0_i32_1 = arith.constant 0 : i32
    return %c0_i32, %c0_i32_0 : i32, i32
  }
  func.func @transform_3(%arg0: i32) -> (i32, i32) {
    %c0_i32 = arith.constant 0 : i32
    %c0_i32_0 = arith.constant 0 : i32
    %c0_i32_1 = arith.constant 0 : i32
    return %c0_i32, %c0_i32_0 : i32, i32
  }
  func.func @transform_4(%arg0: i32) -> (i32, i32) {
    %c0_i32 = arith.constant 0 : i32
    %c0_i32_0 = arith.constant 0 : i32
    %c0_i32_1 = arith.constant 0 : i32
    return %c0_i32, %c0_i32_0 : i32, i32
  }
  func.func @transform_5(%arg0: i32) -> (i32, i32) {
    %c0_i32 = arith.constant 0 : i32
    %c0_i32_0 = arith.constant 0 : i32
    %c0_i32_1 = arith.constant 0 : i32
    return %c0_i32, %c0_i32_0 : i32, i32
  }
  func.func @transform_6(%arg0: i32) -> (i32, i32) {
    %c0_i32 = arith.constant 0 : i32
    %c0_i32_0 = arith.constant 0 : i32
    %c0_i32_1 = arith.constant 0 : i32
    return %c0_i32, %c0_i32_0 : i32, i32
  }
  func.func @transform_7(%arg0: i32) -> (i32, i32) {
    %c0_i32 = arith.constant 0 : i32
    %c0_i32_0 = arith.constant 0 : i32
    return %c0_i32, %arg0 : i32, i32
  }
}

</mosaic_0001>

<llo_original>
// kernel: tpu_custom_call.1
$region0: #{tpu_custom_call.1}
  #allocation0 [shape = 'u32[]', space=smem, size = 0x4, offset = 0x4, fixed_abs, tag = 'smem constant byte address 0x4 - core index']
  #allocation1 [shape = 'u32[144,128]{1,0:T(1,128)}', space=vmem, size = 0x12000, scoped, tag = 'internal scratch']
  #allocation2 [shape = 'f32[1,1]{1,0:T(1,128)S(1)}', space=vmem, size = 0x200, scoped, tag = 'scoped memory for tpu_custom_call.1']
  %s0 = inlined_call_operand.vmem [shape: f32[512,34], index: 0, kind: input, shape index: {}]
  %s1 = inlined_call_operand.vmem [shape: f32[10,34], index: 1, kind: input, shape index: {}]
  %s2 = inlined_call_operand.vmem [shape: f32[10,1], index: 2, kind: input, shape index: {}]
  %s3 = inlined_call_operand.vmem [shape: f32[8,10], index: 3, kind: input, shape index: {}]
  %s4 = inlined_call_operand.vmem [shape: f32[8,1], index: 4, kind: input, shape index: {}]
  %s5 = inlined_call_operand.vmem [shape: f32[1,8], index: 5, kind: input, shape index: {}]
  %s6 = inlined_call_operand.<no memory space> [shape: f32[1,1], index: 6, kind: input, shape index: {}]
  %s7 = inlined_call_operand.hbm [shape: f32[1,512], index: 7, kind: output, shape index: {}]
  %s8 = sld [smem:[#allocation0]]
  $region61: #{tpu_custom_call.1} parent=0
    _
  %s10 = ssub.s32 1, %s8
  %s11 = scalar_select 0, %s10, %s8
  %v12 = vstv %s6
  %13 = vst [vmem:[#allocation2] sm:$0x1] %v12
  $region1: #{tpu_custom_call.1} parent=0
    #allocation3 [shape = 'u8[2048]{0}', space=vmem, size = 0x800, scoped, tag = 'output window, operand 0']
    #allocation4 [shape = 's32[2]{0}', space=sflag, size = 0x8, scoped, tag = 'scoped memory for tpu_custom_call.1']
    %14 = vsyncpa [#allocation4], 0
    %s15 = scalar_lea.sflag [#allocation4], 1
    %16 = vsyncpa %s15, 0
    loop: start=0, step=1, limit=4
    $region2: #{tpu_custom_call.1} parent=1 // loop_pre_header
      _
    $region3: #{tpu_custom_call.1} parent=1 // loop_header
      %s18 = sphi 0, %s22
      %p19 = scmp.ge.s32.totalorder %s18, 4
      %s28 = sphi 0, %s30
      %s31 = sphi 0, %s28
      %s32 = sphi 0, %s31
      %s48 = sphi 0, %s32
      %s52 = sphi 0, %s52
      %s54 = sphi 0, %s52
      %s55 = sphi 0, %s54
      %s69 = sphi 0, %s55
      %s73 = sphi 0, %s73
      %s75 = sphi 0, %s73
      %s76 = sphi 0, %s75
      %s90 = sphi 0, %s76
      %s94 = sphi 0, %s94
      %s96 = sphi 0, %s94
      %s97 = sphi 0, %s96
      %s111 = sphi 0, %s97
      %s115 = sphi 0, %s115
      %s117 = sphi 0, %s115
      %s118 = sphi 0, %s117
      %s132 = sphi 0, %s118
      %s136 = sphi 0, %s136
      %s138 = sphi 0, %s136
      %s139 = sphi 0, %s138
      %s153 = sphi 0, %s139
      %s157 = sphi 0, %s157
      %s159 = sphi 0, %s157
      %s160 = sphi 0, %s159
      %s174 = sphi 0, %s160
      %s180 = sphi 0, %s182
      %s183 = sphi 0, %s180
      %s184 = sphi 0, %s183
      %s200 = sphi 0, %s184
    $region4: #{tpu_custom_call.1} parent=1 // loop_header_branch
      %21 = sbr.rel (%p19) target = $region8
    $region5: #{tpu_custom_call.1} parent=1 // loop_body
      %s23 = ssub.s32 %s18, 1
      %s24 = ssub.s32 %s18, 2
      %s25 = sadd.s32 %s18, 1
      %s26 = ssub.s32 %s18, %s25
      %p27 = scmp.eq.s32.totalorder %s26, 0
      %s29 = sadd.s32 %s28, 1
      %s30 = scalar_select %p27, %s28, %s29
      %p33 = pneg %p27
      %p34 = scmp.eq.s32.totalorder %s18, 1
      %p35 = por %p33, %p34
      %p36 = scmp.ne.s32.totalorder %s28, %s31
      %p37 = scmp.eq.s32.totalorder %s18, 0
      %p38 = por %p36, %p37
      %p39 = scmp.ne.s32.totalorder %s28, %s31
      %p40 = scmp.eq.s32.totalorder %s23, 1
      %p41 = por %p39, %p40
      %p42 = scmp.ne.s32.totalorder %s31, %s32
      %p43 = scmp.eq.s32.totalorder %s23, 0
      %p44 = por %p42, %p43
      %p45 = scmp.ne.s32.totalorder %s31, %s32
      %p46 = scmp.eq.s32.totalorder %s24, 1
      %p47 = por %p45, %p46
      %p49 = scmp.ne.s32.totalorder %s32, %s48
      %p50 = scmp.eq.s32.totalorder %s24, 0
      %p51 = por %p49, %p50
      %s53 = sadd.s32 %s52, 1
      %p56 = scmp.eq.s32.totalorder %s18, 1
      %p57 = scmp.ne.s32.totalorder %s52, %s54
      %p58 = scmp.eq.s32.totalorder %s18, 0
      %p59 = por %p57, %p58
      %p60 = scmp.ne.s32.totalorder %s52, %s54
      %p61 = scmp.eq.s32.totalorder %s23, 1
      %p62 = por %p60, %p61
      %p63 = scmp.ne.s32.totalorder %s54, %s55
      %p64 = scmp.eq.s32.totalorder %s23, 0
      %p65 = por %p63, %p64
      %p66 = scmp.ne.s32.totalorder %s54, %s55
      %p67 = scmp.eq.s32.totalorder %s24, 1
      %p68 = por %p66, %p67
      %p70 = scmp.ne.s32.totalorder %s55, %s69
      %p71 = scmp.eq.s32.totalorder %s24, 0
      %p72 = por %p70, %p71
      %s74 = sadd.s32 %s73, 1
      %p77 = scmp.eq.s32.totalorder %s18, 1
      %p78 = scmp.ne.s32.totalorder %s73, %s75
      %p79 = scmp.eq.s32.totalorder %s18, 0
      %p80 = por %p78, %p79
      %p81 = scmp.ne.s32.totalorder %s73, %s75
      %p82 = scmp.eq.s32.totalorder %s23, 1
      %p83 = por %p81, %p82
      %p84 = scmp.ne.s32.totalorder %s75, %s76
      %p85 = scmp.eq.s32.totalorder %s23, 0
      %p86 = por %p84, %p85
      %p87 = scmp.ne.s32.totalorder %s75, %s76
      %p88 = scmp.eq.s32.totalorder %s24, 1
      %p89 = por %p87, %p88
      %p91 = scmp.ne.s32.totalorder %s76, %s90
      %p92 = scmp.eq.s32.totalorder %s24, 0
      %p93 = por %p91, %p92
      %s95 = sadd.s32 %s94, 1
      %p98 = scmp.eq.s32.totalorder %s18, 1
      %p99 = scmp.ne.s32.totalorder %s94, %s96
      %p100 = scmp.eq.s32.totalorder %s18, 0
      %p101 = por %p99, %p100
      %p102 = scmp.ne.s32.totalorder %s94, %s96
      %p103 = scmp.eq.s32.totalorder %s23, 1
      %p104 = por %p102, %p103
      %p105 = scmp.ne.s32.totalorder %s96, %s97
      %p106 = scmp.eq.s32.totalorder %s23, 0
      %p107 = por %p105, %p106
      %p108 = scmp.ne.s32.totalorder %s96, %s97
      %p109 = scmp.eq.s32.totalorder %s24, 1
      %p110 = por %p108, %p109
      %p112 = scmp.ne.s32.totalorder %s97, %s111
      %p113 = scmp.eq.s32.totalorder %s24, 0
      %p114 = por %p112, %p113
      %s116 = sadd.s32 %s115, 1
      %p119 = scmp.eq.s32.totalorder %s18, 1
      %p120 = scmp.ne.s32.totalorder %s115, %s117
      %p121 = scmp.eq.s32.totalorder %s18, 0
      %p122 = por %p120, %p121
      %p123 = scmp.ne.s32.totalorder %s115, %s117
      %p124 = scmp.eq.s32.totalorder %s23, 1
      %p125 = por %p123, %p124
      %p126 = scmp.ne.s32.totalorder %s117, %s118
      %p127 = scmp.eq.s32.totalorder %s23, 0
      %p128 = por %p126, %p127
      %p129 = scmp.ne.s32.totalorder %s117, %s118
      %p130 = scmp.eq.s32.totalorder %s24, 1
      %p131 = por %p129, %p130
      %p133 = scmp.ne.s32.totalorder %s118, %s132
      %p134 = scmp.eq.s32.totalorder %s24, 0
      %p135 = por %p133, %p134
      %s137 = sadd.s32 %s136, 1
      %p140 = scmp.eq.s32.totalorder %s18, 1
      %p141 = scmp.ne.s32.totalorder %s136, %s138
      %p142 = scmp.eq.s32.totalorder %s18, 0
      %p143 = por %p141, %p142
      %p144 = scmp.ne.s32.totalorder %s136, %s138
      %p145 = scmp.eq.s32.totalorder %s23, 1
      %p146 = por %p144, %p145
      %p147 = scmp.ne.s32.totalorder %s138, %s139
      %p148 = scmp.eq.s32.totalorder %s23, 0
      %p149 = por %p147, %p148
      %p150 = scmp.ne.s32.totalorder %s138, %s139
      %p151 = scmp.eq.s32.totalorder %s24, 1
      %p152 = por %p150, %p151
      %p154 = scmp.ne.s32.totalorder %s139, %s153
      %p155 = scmp.eq.s32.totalorder %s24, 0
      %p156 = por %p154, %p155
      %s158 = sadd.s32 %s157, 1
      %p161 = scmp.eq.s32.totalorder %s18, 1
      %p162 = scmp.ne.s32.totalorder %s157, %s159
      %p163 = scmp.eq.s32.totalorder %s18, 0
      %p164 = por %p162, %p163
      %p165 = scmp.ne.s32.totalorder %s157, %s159
      %p166 = scmp.eq.s32.totalorder %s23, 1
      %p167 = por %p165, %p166
      %p168 = scmp.ne.s32.totalorder %s159, %s160
      %p169 = scmp.eq.s32.totalorder %s23, 0
      %p170 = por %p168, %p169
      %p171 = scmp.ne.s32.totalorder %s159, %s160
      %p172 = scmp.eq.s32.totalorder %s24, 1
      %p173 = por %p171, %p172
      %p175 = scmp.ne.s32.totalorder %s160, %s174
      %p176 = scmp.eq.s32.totalorder %s24, 0
      %p177 = por %p175, %p176
      %s178 = ssub.s32 %s18, %s25
      %p179 = scmp.eq.s32.totalorder %s178, 0
      %s181 = sadd.s32 %s180, 1
      %s182 = scalar_select %p179, %s180, %s181
      %p185 = pneg %p179
      %p186 = scmp.eq.s32.totalorder %s18, 1
      %p187 = por %p185, %p186
      %p188 = scmp.ne.s32.totalorder %s180, %s183
      %p189 = scmp.eq.s32.totalorder %s18, 0
      %p190 = por %p188, %p189
      %p191 = scmp.ne.s32.totalorder %s180, %s183
      %p192 = scmp.eq.s32.totalorder %s23, 1
      %p193 = por %p191, %p192
      %p194 = scmp.ne.s32.totalorder %s183, %s184
      %p195 = scmp.eq.s32.totalorder %s23, 0
      %p196 = por %p194, %p195
      %p197 = scmp.ne.s32.totalorder %s183, %s184
      %p198 = scmp.eq.s32.totalorder %s24, 1
      %p199 = por %p197, %p198
      %p201 = scmp.ne.s32.totalorder %s184, %s200
      %p202 = scmp.eq.s32.totalorder %s24, 0
      %p203 = por %p201, %p202
      %p204 = scmp.le.s32.totalorder 1, %s18
      %p205 = scmp.lt.s32.totalorder %s18, 3
      %p206 = pnand %p204, %p205
      %p207 = pneg %p206
      // Predicated region
      $region9: #{tpu_custom_call.1} parent=5 // pred_check
        _
      $region10: #{tpu_custom_call.1} parent=5 // pred_check_branch
        %209 = sbr.rel (%p206) target = $region12
      $region11: #{tpu_custom_call.1} parent=5 // pred_region
        %s210 = ssub.s32 %s18, 1
        // Predicated region
        $region13: #{tpu_custom_call.1} parent=11 // pred_check
          %p211 = pneg %p65
        $region14: #{tpu_custom_call.1} parent=11 // pred_check_branch
          %213 = sbr.rel (%p211) target = $region16
        $region15: #{tpu_custom_call.1} parent=11 // pred_region
          _
        $region16: #{tpu_custom_call.1} parent=11 // pred_fallthru
          _
        // Predicated region
        $region17: #{tpu_custom_call.1} parent=11 // pred_check
          %p214 = pneg %p86
        $region18: #{tpu_custom_call.1} parent=11 // pred_check_branch
          %216 = sbr.rel (%p214) target = $region20
        $region19: #{tpu_custom_call.1} parent=11 // pred_region
          _
        $region20: #{tpu_custom_call.1} parent=11 // pred_fallthru
          _
        // Predicated region
        $region21: #{tpu_custom_call.1} parent=11 // pred_check
          %p217 = pneg %p107
        $region22: #{tpu_custom_call.1} parent=11 // pred_check_branch
          %219 = sbr.rel (%p217) target = $region24
        $region23: #{tpu_custom_call.1} parent=11 // pred_region
          _
        $region24: #{tpu_custom_call.1} parent=11 // pred_fallthru
          _
        // Predicated region
        $region25: #{tpu_custom_call.1} parent=11 // pred_check
          %p220 = pneg %p128
        $region26: #{tpu_custom_call.1} parent=11 // pred_check_branch
          %222 = sbr.rel (%p220) target = $region28
        $region27: #{tpu_custom_call.1} parent=11 // pred_region
          _
        $region28: #{tpu_custom_call.1} parent=11 // pred_fallthru
          _
        // Predicated region
        $region29: #{tpu_custom_call.1} parent=11 // pred_check
          %p223 = pneg %p149
        $region30: #{tpu_custom_call.1} parent=11 // pred_check_branch
          %225 = sbr.rel (%p223) target = $region32
        $region31: #{tpu_custom_call.1} parent=11 // pred_region
          _
        $region32: #{tpu_custom_call.1} parent=11 // pred_fallthru
          _
        // Predicated region
        $region33: #{tpu_custom_call.1} parent=11 // pred_check
          %p226 = pneg %p170
        $region34: #{tpu_custom_call.1} parent=11 // pred_check_branch
          %228 = sbr.rel (%p226) target = $region36
        $region35: #{tpu_custom_call.1} parent=11 // pred_region
          _
        $region36: #{tpu_custom_call.1} parent=11 // pred_fallthru
          _
      $region12: #{tpu_custom_call.1} parent=5 // pred_fallthru
        _
      %p229 = scmp.lt.s32.totalorder %s18, 2
      // Predicated region
      $region37: #{tpu_custom_call.1} parent=5 // pred_check
        %p230 = pneg %p229
      $region38: #{tpu_custom_call.1} parent=5 // pred_check_branch
        %232 = sbr.rel (%p230) target = $region40
      $region39: #{tpu_custom_call.1} parent=5 // pred_region
        // Predicated region
        $region41: #{tpu_custom_call.1} parent=39 // pred_check
          %p233 = pneg %p38
        $region42: #{tpu_custom_call.1} parent=39 // pred_check_branch
          %235 = sbr.rel (%p233) target = $region44
        $region43: #{tpu_custom_call.1} parent=39 // pred_region
          %s236 = smul.u32 32, %s18
          %p237 = scmp.lt.s32.totalorder %s236, 63
          %s238 = scalar_select %p237, %s236, 63
          %s239 = smul.addr %s238, 8
          %s240 = scalar_lea.vmem %s0, %s239
          %s241 = smul.u32 32, %s18
        $region44: #{tpu_custom_call.1} parent=39 // pred_fallthru
          _
      $region40: #{tpu_custom_call.1} parent=5 // pred_fallthru
        _
      %p242 = scmp.le.s32.totalorder 1, %s18
      %p243 = scmp.lt.s32.totalorder %s18, 3
      %p244 = pnand %p242, %p243
      %p245 = pneg %p244
      // Predicated region
      $region45: #{tpu_custom_call.1} parent=5 // pred_check
        _
      $region46: #{tpu_custom_call.1} parent=5 // pred_check_branch
        %247 = sbr.rel (%p244) target = $region48
      $region47: #{tpu_custom_call.1} parent=5 // pred_region
        %s248 = ssub.s32 %s18, 1
        %s249 = smul.u32 32, %s23
        %p250 = scmp.lt.s32.totalorder %s249, 63
        %s251 = scalar_select %p250, %s249, 63
        %s252 = smul.addr %s251, 8
        %s253 = scalar_lea.vmem %s0, %s252
        %p254 = pneg %p44
        %p255 = pneg %p41
        %p256 = pneg %p65
        %p257 = pneg %p62
        %p258 = pneg %p86
        %p259 = pneg %p83
        %p260 = pneg %p107
        %p261 = pneg %p104
        %p262 = pneg %p128
        %p263 = pneg %p125
        %p264 = pneg %p149
        %p265 = pneg %p146
        %p266 = pneg %p170
        %p267 = pneg %p167
        %p268 = pneg %p196
        %p269 = pneg %p193
        %s270 = sand.u32 %s183, 1
        %s271 = scalar_lea.sflag [#allocation4], %s270
        %s272 = sand.u32 %s183, 1
        %s273 = smul.addr %s272, 2
        %s274 = scalar_lea.vmem [#allocation3], %s273
        %s275 = smul.u32 32, %s23
        %p276 = scmp.lt.s32.totalorder %s275, 63
        %s277 = scalar_select %p276, %s275, 63
        %s278 = smul.addr %s277, 8
        %s279 = scalar_lea.vmem %s0, %s278
        %s280 = smul.u32 32, %s23
        %s281 = smul.u32 2, %s23
        %v282 = vld [vmem:[%s1] sm:$0xff]
        %v283 = vld [vmem:[%s1 + $0x8] sm:$0x3]
        %v284 = vld [vmem:[%s279] sm:$0xff]
        %v285 = vld [vmem:[%s279 + $0x8] sm:$0xff]
        %v286 = vld [vmem:[%s279 + $0x10] sm:$0xff]
        %v287 = vld [vmem:[%s279 + $0x18] sm:$0xff]
        %v288 = vld [vmem:[%s279 + $0x20] sm:$0xff]
        %v289 = vld [vmem:[%s279 + $0x28] sm:$0xff]
        %v290 = vld [vmem:[%s279 + $0x30] sm:$0xff]
        %v291 = vld [vmem:[%s279 + $0x38] sm:$0xff]
        %v292 = vld [vmem:[%s279 + $0x40] sm:$0xff]
        %v293 = vld [vmem:[%s279 + $0x48] sm:$0xff]
        %v294 = vld [vmem:[%s279 + $0x50] sm:$0xff]
        %v295 = vld [vmem:[%s279 + $0x58] sm:$0xff]
        %v296 = vld [vmem:[%s279 + $0x60] sm:$0xff]
        %v297 = vld [vmem:[%s279 + $0x68] sm:$0xff]
        %v298 = vld [vmem:[%s279 + $0x70] sm:$0xff]
        %v299 = vld [vmem:[%s279 + $0x78] sm:$0xff]
        %v300 = vld [vmem:[%s279 + $0x80] sm:$0xff]
        %v301 = vld [vmem:[%s279 + $0x88] sm:$0xff]
        %v302 = vld [vmem:[%s279 + $0x90] sm:$0xff]
        %v303 = vld [vmem:[%s279 + $0x98] sm:$0xff]
        %v304 = vld [vmem:[%s279 + $0xa0] sm:$0xff]
        %v305 = vld [vmem:[%s279 + $0xa8] sm:$0xff]
        %v306 = vld [vmem:[%s279 + $0xb0] sm:$0xff]
        %v307 = vld [vmem:[%s279 + $0xb8] sm:$0xff]
        %v308 = vld [vmem:[%s279 + $0xc0] sm:$0xff]
        %v309 = vld [vmem:[%s279 + $0xc8] sm:$0xff]
        %v310 = vld [vmem:[%s279 + $0xd0] sm:$0xff]
        %v311 = vld [vmem:[%s279 + $0xd8] sm:$0xff]
        %v312 = vld [vmem:[%s279 + $0xe0] sm:$0xff]
        %v313 = vld [vmem:[%s279 + $0xe8] sm:$0xff]
        %v314 = vld [vmem:[%s279 + $0xf0] sm:$0xff]
        %v315 = vld [vmem:[%s279 + $0xf8] sm:$0xff]
        %v316 = vld [vmem:[%s2] sm:$0xff]
        %v317 = vld [vmem:[%s2 + $0x8] sm:$0x3]
        %319 = vset.pattern.permute.xlu0 0
        %320 = vperm.xlu0 %319, %v316
        %v321 = vpop.permute.xlu0 %320
        %324 = vset.pattern.permute.xlu0 0
        %325 = vperm.xlu0 %324, %v317
        %v326 = vpop.permute.xlu0 %325
        %vm328 = vcmask 277504
        %v330 = vsel %vm328, %v282, 0
        %v333 = vsel %vm328, %v283, 0
        %v336 = vsel %vm328, %v284, 0
        %v339 = vsel %vm328, %v285, 0
        %v342 = vsel %vm328, %v286, 0
        %v345 = vsel %vm328, %v287, 0
        %v348 = vsel %vm328, %v288, 0
        %v351 = vsel %vm328, %v289, 0
        %v354 = vsel %vm328, %v290, 0
        %v357 = vsel %vm328, %v291, 0
        %v360 = vsel %vm328, %v292, 0
        %v363 = vsel %vm328, %v293, 0
        %v366 = vsel %vm328, %v294, 0
        %v369 = vsel %vm328, %v295, 0
        %v372 = vsel %vm328, %v296, 0
        %v375 = vsel %vm328, %v297, 0
        %v378 = vsel %vm328, %v298, 0
        %v381 = vsel %vm328, %v299, 0
        %v384 = vsel %vm328, %v300, 0
        %v387 = vsel %vm328, %v301, 0
        %v390 = vsel %vm328, %v302, 0
        %v393 = vsel %vm328, %v303, 0
        %v396 = vsel %vm328, %v304, 0
        %v399 = vsel %vm328, %v305, 0
        %v402 = vsel %vm328, %v306, 0
        %v405 = vsel %vm328, %v307, 0
        %v408 = vsel %vm328, %v308, 0
        %v411 = vsel %vm328, %v309, 0
        %v414 = vsel %vm328, %v310, 0
        %v417 = vsel %vm328, %v311, 0
        %v420 = vsel %vm328, %v312, 0
        %v423 = vsel %vm328, %v313, 0
        %v426 = vsel %vm328, %v314, 0
        %v429 = vsel %vm328, %v315, 0
        %431 = vmatprep.subr.mxu0 0.0
        %432 = vmatpush1.xpose.msra.mxu0 %v381
        %433 = vmatprep.subr.mxu0 0.0
        %434 = vmatpush1.xpose.msra.mxu0 %v378
        %435 = vmatprep.subr.mxu0 0.0
        %436 = vmatpush1.xpose.msra.mxu0 %v375
        %437 = vmatprep.subr.mxu0 0.0
        %438 = vmatpush1.xpose.msra.mxu0 %v372
        %439 = vmatprep.subr.mxu0 0.0
        %440 = vmatpush1.xpose.msra.mxu0 %v369
        %441 = vmatprep.subr.mxu0 0.0
        %442 = vmatpush1.xpose.msra.mxu0 %v366
        %443 = vmatprep.subr.mxu0 0.0
        %444 = vmatpush1.xpose.msra.mxu0 %v363
        %445 = vmatprep.subr.mxu0 0.0
        %446 = vmatpush1.xpose.msra.mxu0 %v360
        %447 = vmatprep.subr.mxu0 0.0
        %448 = vmatpush1.xpose.msra.mxu0 %v357
        %449 = vmatprep.subr.mxu0 0.0
        %450 = vmatpush1.xpose.msra.mxu0 %v354
        %451 = vmatprep.subr.mxu0 0.0
        %452 = vmatpush1.xpose.msra.mxu0 %v351
        %453 = vmatprep.subr.mxu0 0.0
        %454 = vmatpush1.xpose.msra.mxu0 %v348
        %455 = vmatprep.subr.mxu0 0.0
        %456 = vmatpush1.xpose.msra.mxu0 %v345
        %457 = vmatprep.subr.mxu0 0.0
        %458 = vmatpush1.xpose.msra.mxu0 %v342
        %459 = vmatprep.subr.mxu0 0.0
        %460 = vmatpush1.xpose.msra.mxu0 %v339
        %461 = vmatprep.subr.mxu0 0.0
        %462 = vmatpush1.xpose.msra.mxu0 %v336
        %463 = vmatprep.subr.mxu0 0.0
        %464 = vmatpush2.xpose.msra.mxu0 %v429
        %465 = vmatprep.subr.mxu0 0.0
        %466 = vmatpush2.xpose.msra.mxu0 %v426
        %467 = vmatprep.subr.mxu0 0.0
        %468 = vmatpush2.xpose.msra.mxu0 %v423
        %469 = vmatprep.subr.mxu0 0.0
        %470 = vmatpush2.xpose.msra.mxu0 %v420
        %471 = vmatprep.subr.mxu0 0.0
        %472 = vmatpush2.xpose.msra.mxu0 %v417
        %473 = vmatprep.subr.mxu0 0.0
        %474 = vmatpush2.xpose.msra.mxu0 %v414
        %475 = vmatprep.subr.mxu0 0.0
        %476 = vmatpush2.xpose.msra.mxu0 %v411
        %477 = vmatprep.subr.mxu0 0.0
        %478 = vmatpush2.xpose.msra.mxu0 %v408
        %479 = vmatprep.subr.mxu0 0.0
        %480 = vmatpush2.xpose.msra.mxu0 %v405
        %481 = vmatprep.subr.mxu0 0.0
        %482 = vmatpush2.xpose.msra.mxu0 %v402
        %483 = vmatprep.subr.mxu0 0.0
        %484 = vmatpush2.xpose.msra.mxu0 %v399
        %485 = vmatprep.subr.mxu0 0.0
        %486 = vmatpush2.xpose.msra.mxu0 %v396
        %487 = vmatprep.subr.mxu0 0.0
        %488 = vmatpush2.xpose.msra.mxu0 %v393
        %489 = vmatprep.subr.mxu0 0.0
        %490 = vmatpush2.xpose.msra.mxu0 %v390
        %491 = vmatprep.subr.mxu0 0.0
        %492 = vmatpush2.xpose.msra.mxu0 %v387
        %493 = vmatprep.subr.mxu0 0.0
        %494 = vmatpush2.xpose.msra.mxu0 %v384
        %495 = vmatprep.mubr.f32.mxu0 0.0
        %496 = vmatmul.mubr.f32.gmra.mxu0 %v330
        %v497 = vpop.f32.mrf.mxu0
        %v498 = vadd.f32 %v321, %v497
        %v499 = vpop.f32.mrf.mxu0
        %v500 = vadd.f32 %v321, %v499
        %501 = vmatprep.mubr.f32.mxu0 0.0
        %502 = vmatmul.mubr.f32.gmra.mxu0 %v333
        %v503 = vpop.f32.mrf.mxu0
        %v504 = vadd.f32 %v326, %v503
        %v505 = vpop.f32.mrf.mxu0
        %v506 = vadd.f32 %v326, %v505
        %507 = vdwg.mxu0
        %v508 = vmax.f32 %v498, 0.0
        %v509 = vmax.f32 %v500, 0.0
        %v510 = vmax.f32 %v504, 0.0
        %v511 = vmax.f32 %v506, 0.0
        %v512 = vld [vmem:[%s3] sm:$0xff]
        %v513 = vld [vmem:[%s4] sm:$0xff]
        %515 = vset.pattern.permute.xlu0 0
        %516 = vperm.xlu0 %515, %v513
        %v517 = vpop.permute.xlu0 %516
        %vm519 = vcmask 80896
        %v521 = vsel %vm519, %v512, 0
        %vm523 = vcmask 1041408
        %v525 = vsel %vm523, %v510, 0
        %v528 = vsel %vm523, %v511, 0
        %530 = vmatprep.subr.mxu0 0.0
        %531 = vmatpush1.msra.mxu0 0.0
        %532 = vmatprep.subr.mxu0 0.0
        %533 = vmatpush1.msra.mxu0 0.0
        %534 = vmatprep.subr.mxu0 0.0
        %535 = vmatpush1.msra.mxu0 0.0
        %536 = vmatprep.subr.mxu0 0.0
        %537 = vmatpush1.msra.mxu0 0.0
        %538 = vmatprep.subr.mxu0 0.0
        %539 = vmatpush1.msra.mxu0 0.0
        %540 = vmatprep.subr.mxu0 0.0
        %541 = vmatpush1.msra.mxu0 0.0
        %542 = vmatprep.subr.mxu0 0.0
        %543 = vmatpush1.msra.mxu0 0.0
        %544 = vmatprep.subr.mxu0 0.0
        %545 = vmatpush1.msra.mxu0 0.0
        %546 = vmatprep.subr.mxu0 0.0
        %547 = vmatpush1.msra.mxu0 0.0
        %548 = vmatprep.subr.mxu0 0.0
        %549 = vmatpush1.msra.mxu0 0.0
        %550 = vmatprep.subr.mxu0 0.0
        %551 = vmatpush1.msra.mxu0 0.0
        %552 = vmatprep.subr.mxu0 0.0
        %553 = vmatpush1.msra.mxu0 0.0
        %554 = vmatprep.subr.mxu0 0.0
        %555 = vmatpush1.msra.mxu0 0.0
        %556 = vmatprep.subr.mxu0 0.0
        %557 = vmatpush1.msra.mxu0 0.0
        %558 = vmatprep.subr.mxu0 %v528
        %559 = vmatpush1.msra.mxu0 %v525
        %560 = vmatprep.subr.mxu0 %v509
        %561 = vmatpush1.msra.mxu0 %v508
        %562 = vmatprep.subr.mxu0 0.0
        %563 = vmatpush2.msra.mxu0 0.0
        %564 = vmatprep.subr.mxu0 0.0
        %565 = vmatpush2.msra.mxu0 0.0
        %566 = vmatprep.subr.mxu0 0.0
        %567 = vmatpush2.msra.mxu0 0.0
        %568 = vmatprep.subr.mxu0 0.0
        %569 = vmatpush2.msra.mxu0 0.0
        %570 = vmatprep.subr.mxu0 0.0
        %571 = vmatpush2.msra.mxu0 0.0
        %572 = vmatprep.subr.mxu0 0.0
        %573 = vmatpush2.msra.mxu0 0.0
        %574 = vmatprep.subr.mxu0 0.0
        %575 = vmatpush2.msra.mxu0 0.0
        %576 = vmatprep.subr.mxu0 0.0
        %577 = vmatpush2.msra.mxu0 0.0
        %578 = vmatprep.subr.mxu0 0.0
        %579 = vmatpush2.msra.mxu0 0.0
        %580 = vmatprep.subr.mxu0 0.0
        %581 = vmatpush2.msra.mxu0 0.0
        %582 = vmatprep.subr.mxu0 0.0
        %583 = vmatpush2.msra.mxu0 0.0
        %584 = vmatprep.subr.mxu0 0.0
        %585 = vmatpush2.msra.mxu0 0.0
        %586 = vmatprep.subr.mxu0 0.0
        %587 = vmatpush2.msra.mxu0 0.0
        %588 = vmatprep.subr.mxu0 0.0
        %589 = vmatpush2.msra.mxu0 0.0
        %590 = vmatprep.subr.mxu0 0.0
        %591 = vmatpush2.msra.mxu0 0.0
        %592 = vmatprep.subr.mxu0 0.0
        %593 = vmatpush2.msra.mxu0 0.0
        %594 = vmatprep.mubr.f32.mxu0 0.0
        %595 = vmatmul.mubr.f32.gmra.mxu0 %v521
        %v596 = vpop.f32.mrf.mxu0
        %v597 = vadd.f32 %v517, %v596
        %v598 = vpop.f32.mrf.mxu0
        %v599 = vadd.f32 %v517, %v598
        %600 = vdwg.mxu0
        %v601 = vmax.f32 %v597, 0.0
        %v602 = vmax.f32 %v599, 0.0
        %v603 = vld [vmem:[%s5] sm:$0x1]
        %v604 = vld [vmem:[#allocation2] sm:$0x1]
        %606 = vset.pattern.permute.xlu0 0
        %607 = vperm.xlu0 %606, %v604
        %v608 = vpop.permute.xlu0 %607
        %v610 = vlaneseq
        %v611 = vshrl.u32 %v610, 7
        %v612 = vsub.s32 0, %v611
        %v613 = vrot.slane %v608, %v612
        %vm614 = vcmask 64512
        %v616 = vsel %vm614, %v603, 0
        %618 = vmatprep.subr.mxu0 0.0
        %619 = vmatpush1.msra.mxu0 0.0
        %620 = vmatprep.subr.mxu0 0.0
        %621 = vmatpush1.msra.mxu0 0.0
        %622 = vmatprep.subr.mxu0 0.0
        %623 = vmatpush1.msra.mxu0 0.0
        %624 = vmatprep.subr.mxu0 0.0
        %625 = vmatpush1.msra.mxu0 0.0
        %626 = vmatprep.subr.mxu0 0.0
        %627 = vmatpush1.msra.mxu0 0.0
        %628 = vmatprep.subr.mxu0 0.0
        %629 = vmatpush1.msra.mxu0 0.0
        %630 = vmatprep.subr.mxu0 0.0
        %631 = vmatpush1.msra.mxu0 0.0
        %632 = vmatprep.subr.mxu0 0.0
        %633 = vmatpush1.msra.mxu0 0.0
        %634 = vmatprep.subr.mxu0 0.0
        %635 = vmatpush1.msra.mxu0 0.0
        %636 = vmatprep.subr.mxu0 0.0
        %637 = vmatpush1.msra.mxu0 0.0
        %638 = vmatprep.subr.mxu0 0.0
        %639 = vmatpush1.msra.mxu0 0.0
        %640 = vmatprep.subr.mxu0 0.0
        %641 = vmatpush1.msra.mxu0 0.0
        %642 = vmatprep.subr.mxu0 0.0
        %643 = vmatpush1.msra.mxu0 0.0
        %644 = vmatprep.subr.mxu0 0.0
        %645 = vmatpush1.msra.mxu0 0.0
        %646 = vmatprep.subr.mxu0 0.0
        %647 = vmatpush1.msra.mxu0 0.0
        %648 = vmatprep.subr.mxu0 %v602
        %649 = vmatpush1.msra.mxu0 %v601
        %650 = vmatprep.subr.mxu0 0.0
        %651 = vmatpush2.msra.mxu0 0.0
        %652 = vmatprep.subr.mxu0 0.0
        %653 = vmatpush2.msra.mxu0 0.0
        %654 = vmatprep.subr.mxu0 0.0
        %655 = vmatpush2.msra.mxu0 0.0
        %656 = vmatprep.subr.mxu0 0.0
        %657 = vmatpush2.msra.mxu0 0.0
        %658 = vmatprep.subr.mxu0 0.0
        %659 = vmatpush2.msra.mxu0 0.0
        %660 = vmatprep.subr.mxu0 0.0
        %661 = vmatpush2.msra.mxu0 0.0
        %662 = vmatprep.subr.mxu0 0.0
        %663 = vmatpush2.msra.mxu0 0.0
        %664 = vmatprep.subr.mxu0 0.0
        %665 = vmatpush2.msra.mxu0 0.0
        %666 = vmatprep.subr.mxu0 0.0
        %667 = vmatpush2.msra.mxu0 0.0
        %668 = vmatprep.subr.mxu0 0.0
        %669 = vmatpush2.msra.mxu0 0.0
        %670 = vmatprep.subr.mxu0 0.0
        %671 = vmatpush2.msra.mxu0 0.0
        %672 = vmatprep.subr.mxu0 0.0
        %673 = vmatpush2.msra.mxu0 0.0
        %674 = vmatprep.subr.mxu0 0.0
        %675 = vmatpush2.msra.mxu0 0.0
        %676 = vmatprep.subr.mxu0 0.0
        %677 = vmatpush2.msra.mxu0 0.0
        %678 = vmatprep.subr.mxu0 0.0
        %679 = vmatpush2.msra.mxu0 0.0
        %680 = vmatprep.subr.mxu0 0.0
        %681 = vmatpush2.msra.mxu0 0.0
        %682 = vmatprep.mubr.f32.mxu0 0.0
        %683 = vmatmul.mubr.f32.gmra.mxu0 %v616
        %v684 = vpop.f32.mrf.mxu0
        %v685 = vadd.f32 %v613, %v684
        %v686 = vpop.f32.mrf.mxu0
        %v687 = vadd.f32 %v613, %v686
        %688 = vdwg.mxu0
        %v689 = vsub.f32 0.0, %v685
        %v690 = vsub.f32 0.0, %v687
        %v691 = vmul.f32 %v689, 1.442695
        %v692 = vpow.pop %v691
        %v693 = vmul.f32 %v690, 1.442695
        %v694 = vpow.pop %v693
        %v695 = vadd.f32 %v692, 1.0
        %v696 = vadd.f32 %v694, 1.0
        %v697 = vrcp.pop %v695
        %v698 = vrcp.pop %v696
        %v701 = vcombine.low %v697, %v698
        %v703 = vunpack.c.l.s4 1966171168
        %v704 = vunpack.c.0.s8 %v703
        %v705 = vlaneseq
        %v706 = vshrl.u32 %v705, 7
        %v707 = vsub.s32 %v704, %v706
        %v708 = vrot.slane %v701, %v707
        %v710 = vunpack.c.l.s4 1966171168
        %v711 = vunpack.c.0.s8 %v710
        %v712 = vlaneseq
        %v713 = vshrl.u32 %v712, 7
        %v714 = vsub.s32 %v711, %v713
        %v715 = vrot.slane %v708, %v714
        %v717 = vlaneseq
        %vm718 = vcmp.ge.s32.totalorder %v717, 0
        %vm719 = vcmp.lt.s32.totalorder %v717, 256
        %vm720 = vmand %vm718, %vm719
        %721 = vst.msk [vmem:[%s274] sm:$0x3] %vm720, %v715
        %s722 = sand.u32 %s183, 1
        %s723 = scalar_lea.sflag [#allocation4], %s722
        %s724 = sand.u32 %s183, 1
        %s725 = smul.addr %s724, 2
        %s726 = scalar_lea.vmem [#allocation3], %s725
        // Predicated region
        $region49: #{tpu_custom_call.1} parent=47 // pred_check
          %p727 = pneg %p193
        $region50: #{tpu_custom_call.1} parent=47 // pred_check_branch
          %729 = sbr.rel (%p727) target = $region52
        $region51: #{tpu_custom_call.1} parent=47 // pred_region
          %s730 = smul.u32 2, %s23
          %s732 = ssub.s32 32, 32
          %733 = vsyncadd %s723, %s732
          %s734 = smul.addr %s730, 16
          %s735 = scalar_lea.hbm %s7, %s734
          %s737 = sshll.u32 %s726, 4
          %s738 = int_to_ptr.vmem [resolvable:$true] %s737
          %740 = dma.vmem_to_hbm [thread:$0]  %s738, 32, %s735, %s723
        $region52: #{tpu_custom_call.1} parent=47 // pred_fallthru
          _
      $region48: #{tpu_custom_call.1} parent=5 // pred_fallthru
        _
      %p741 = scmp.le.s32.totalorder 2, %s18
      // Predicated region
      $region53: #{tpu_custom_call.1} parent=5 // pred_check
        %p742 = pneg %p741
      $region54: #{tpu_custom_call.1} parent=5 // pred_check_branch
        %744 = sbr.rel (%p742) target = $region56
      $region55: #{tpu_custom_call.1} parent=5 // pred_region
        %s745 = ssub.s32 %s18, 2
        // Predicated region
        $region57: #{tpu_custom_call.1} parent=55 // pred_check
          %p746 = pneg %p199
        $region58: #{tpu_custom_call.1} parent=55 // pred_check_branch
          %748 = sbr.rel (%p746) target = $region60
        $region59: #{tpu_custom_call.1} parent=55 // pred_region
          %s749 = sand.u32 %s184, 1
          %s750 = scalar_lea.sflag [#allocation4], %s749
          %s751 = sand.u32 %s184, 1
          %s752 = smul.addr %s751, 2
          %s753 = scalar_lea.vmem [#allocation3], %s752
          %754 = dma.done %s750, 32
        $region60: #{tpu_custom_call.1} parent=55 // pred_fallthru
          _
      $region56: #{tpu_custom_call.1} parent=5 // pred_fallthru
        _
    $region6: #{tpu_custom_call.1} parent=1 // loop_footer
      %s22 = sadd.s32 1, %s18
    $region7: #{tpu_custom_call.1} parent=1 // loop_footer_branch
      %17 = sbr.rel target = $region3
    $region8: #{tpu_custom_call.1} parent=1 // loop_exit
      _
    %755 = vsyncpa [#allocation4], 1
    %s756 = scalar_lea.sflag [#allocation4], 1
    %757 = vsyncpa %s756, 1

</llo_original>
